<compile_context>
chip_gen: v5e
topology: v5e:2x2
jax: 0.10.0
libtpu: 0.0.40
codegen_flags: <defaults>
</compile_context>

<pallas_src>
import functools

import jax
import jax.numpy as jnp
from jax import lax
from jax.experimental import pallas as pl
from jax.experimental.pallas import tpu as pltpu


def _round_up(a, b):
    return ((a + b - 1) // b) * b


def _encoder_norm_kernel(scale_ref, x_ref, o_ref, *, d):
    # scale_ref : (1,) f32 scalar in SMEM -> alpha * beta / eps, folded.
    # x_ref/o_ref: (TM, D) row blocks in VMEM.
    x = x_ref[...].astype(jnp.float32)                       # (TM, D)

    # One-pass statistics: both cross-lane reductions over the same input.
    s1 = jnp.sum(x, axis=-1, keepdims=True)                  # (TM, 1)
    s2 = jnp.sum(x * x, axis=-1, keepdims=True)              # (TM, 1)
    mean = s1 * (1.0 / d)
    # torch.Tensor.std() is the unbiased estimator (divide by D - 1);
    # guard d == 1 against a literal divide-by-zero (torch would give nan).
    denom = max(d - 1.0, 1.0)
    var = jnp.maximum((s2 - s1 * mean) * (1.0 / denom), 0.0)

    # rsqrt on the EUP (own VLIW slot) + folded scalar scale: (TM, 1) column.
    inv = lax.rsqrt(var) * scale_ref[0]

    # Single full-width subtract + single full-width multiply.
    o_ref[...] = ((x - mean) * inv).astype(o_ref.dtype)


def layer_norm_forward(x, alpha, beta, *, eps=1e-6, tm=1024):
    """Pallas LayerNormalization over the last axis of x (any leading shape)."""
    orig_shape = x.shape
    d = int(orig_shape[-1])
    n = 1
    for s in orig_shape[:-1]:
        n *= int(s)
    x2 = x.reshape(n, d)

    itemsize = jnp.dtype(x.dtype).itemsize
    # dtype-correct sublane multiple: f32 -> 8, bf16 -> 16, int8/fp8 -> 32.
    sublane = {4: 8, 2: 16, 1: 32}.get(itemsize, 8)
    n_pad = _round_up(max(n, 1), sublane)

    # VMEM block budget: double-buffered input + output blocks.
    block_budget = 20 * 1024 * 1024
    tm_cap = max(sublane, (block_budget // (4 * d * itemsize)) // sublane * sublane)
    tm = min(int(tm), tm_cap, n_pad)

    # Keep >= 4 grid steps when there are enough rows so v7x's two
    # TensorCores both get work (harmless on single-TC v5e/v6e).
    min_steps = 4
    if n_pad >= min_steps * sublane:
        tm = min(tm, _round_up(pl.cdiv(n_pad, min_steps), sublane))
    tm = max(sublane, (tm // sublane) * sublane)

    grid = (pl.cdiv(n, tm),)

    # Scoped VMEM: pipelined blocks + f32 intermediates + slack, clamped to a
    # range that is safe on every generation (incl. v7x's 64 MiB physical).
    vmem_need = 4 * tm * d * itemsize + 3 * tm * d * 4 + (2 << 20)
    vmem_limit = int(min(max(vmem_need, 16 << 20), 48 << 20))

    # Fold alpha * beta / eps into one SMEM scalar (scalar op, done once).
    scale = (
        jnp.asarray(alpha, jnp.float32).reshape(-1)[0]
        * jnp.asarray(beta, jnp.float32).reshape(-1)[0]
        / jnp.float32(eps)
    ).reshape(1)

    kernel = functools.partial(_encoder_norm_kernel, d=float(d))

    out2 = pl.pallas_call(
        kernel,
        out_shape=jax.ShapeDtypeStruct((n, d), x.dtype),
        grid_spec=pltpu.PrefetchScalarGridSpec(
            num_scalar_prefetch=0,
            grid=grid,
            in_specs=[
                pl.BlockSpec(memory_space=pltpu.MemorySpace.SMEM),  # folded scale
                pl.BlockSpec((tm, d), lambda i: (i, 0)),            # x row block
            ],
            out_specs=pl.BlockSpec((tm, d), lambda i: (i, 0)),
        ),
        compiler_params=pltpu.CompilerParams(
            dimension_semantics=("parallel",),   # rows independent
            vmem_limit_bytes=vmem_limit,
        ),
    )(scale, x2)

    return out2.reshape(orig_shape)


def encoder_forward(x, mask, *, layers=(), alpha=1.0, beta=1.0, eps=1e-6, tm=1024):
    """Encoder.forward: apply layer stack, then the Pallas LayerNormalization."""
    # TODO(synk): the spec's nn.ModuleList `layers` contents are not defined;
    # caller supplies JAX callables (x, mask) -> x here (identity if none).
    for layer in layers:
        x = layer(x, mask)
    return layer_norm_forward(x, alpha, beta, eps=eps, tm=tm)


if __name__ == "__main__":
    # Small deterministic example consistent with the module:
    batch, seq, d_model = 2, 8, 128   # d_model multiple of 128 -> lane-dense stores
    eps = 1e-6

    key = jax.random.PRNGKey(0)
    x = jax.random.normal(key, (batch, seq, d_model), dtype=jnp.float32)
    mask = jnp.ones((batch, 1, seq, seq), dtype=jnp.float32)  # unused (no layers)

    # nn.Parameter(torch.ones(1)) for both alpha and beta
    alpha = jnp.ones((1,), jnp.float32)
    beta = jnp.ones((1,), jnp.float32)

    out = encoder_forward(x, mask, layers=(), alpha=alpha, beta=beta, eps=eps)
    out = jax.block_until_ready(out)

    # Pure-JAX reference matching the PyTorch LayerNormalization exactly.
    mean = jnp.mean(x, axis=-1, keepdims=True)
    std = jnp.std(x, axis=-1, keepdims=True, ddof=1)  # torch .std() is unbiased
    ref = alpha * (x - mean) / (std * eps) * beta

    assert out.shape == (batch, seq, d_model)
    assert bool(jnp.allclose(out, ref, rtol=2e-3, atol=1.0)), float(
        jnp.max(jnp.abs(out - ref))
    )

    print("KERNEL_OK")
</pallas_src>

<mosaic_0001>
module attributes {stable_mosaic.version = 11 : i64} {
  func.func @_encoder_norm_kernel(%arg0: i32, %arg1: memref<1xf32, #tpu.memory_space<smem>>, %arg2: memref<16x128xf32, #tpu.memory_space<vmem>>, %arg3: memref<16x128xf32, #tpu.memory_space<vmem>>) attributes {dimension_semantics = [#tpu.dimension_semantics<parallel>], iteration_bounds = array<i64: 1>, scalar_prefetch = 0 : i64, scratch_operands = 0 : i64, tpu.core_type = #tpu.core_type<tc>, window_params = [{transform_indices = @transform_0, window_bounds = array<i64: 1>}, {transform_indices = @transform_1, window_bounds = array<i64: 16, 128>}, {transform_indices = @transform_2, window_bounds = array<i64: 16, 128>}]} {
    %c0 = arith.constant 0 : index
    %c0_0 = arith.constant 0 : index
    %0 = vector.load %arg2[%c0, %c0_0] : memref<16x128xf32, #tpu.memory_space<vmem>>, vector<16x128xf32>
    %cst = arith.constant dense<0.000000e+00> : vector<16xf32>
    %1 = vector.multi_reduction <add>, %0, %cst [1] : vector<16x128xf32> to vector<16xf32>
    %2 = vector.shape_cast %1 : vector<16xf32> to vector<16x1xf32>
    %3 = arith.mulf %0, %0 : vector<16x128xf32>
    %cst_1 = arith.constant dense<0.000000e+00> : vector<16xf32>
    %4 = vector.multi_reduction <add>, %3, %cst_1 [1] : vector<16x128xf32> to vector<16xf32>
    %5 = vector.shape_cast %4 : vector<16xf32> to vector<16x1xf32>
    %cst_2 = arith.constant 7.812500e-03 : f32
    %6 = vector.broadcast %cst_2 : f32 to vector<16x1xf32>
    %7 = arith.mulf %2, %6 : vector<16x1xf32>
    %8 = arith.mulf %2, %7 : vector<16x1xf32>
    %9 = arith.subf %5, %8 : vector<16x1xf32>
    %cst_3 = arith.constant 0.00787401571 : f32
    %10 = vector.broadcast %cst_3 : f32 to vector<16x1xf32>
    %11 = arith.mulf %9, %10 : vector<16x1xf32>
    %cst_4 = arith.constant 0.000000e+00 : f32
    %12 = vector.broadcast %cst_4 : f32 to vector<16x1xf32>
    %13 = arith.maximumf %11, %12 : vector<16x1xf32>
    %14 = math.rsqrt %13 : vector<16x1xf32>
    %c0_5 = arith.constant 0 : index
    %15 = memref.load %arg1[%c0_5] : memref<1xf32, #tpu.memory_space<smem>>
    %16 = vector.broadcast %15 : f32 to vector<16x1xf32>
    %17 = arith.mulf %14, %16 : vector<16x1xf32>
    %18 = vector.broadcast %7 : vector<16x1xf32> to vector<16x128xf32>
    %19 = arith.subf %0, %18 : vector<16x128xf32>
    %20 = vector.broadcast %17 : vector<16x1xf32> to vector<16x128xf32>
    %21 = arith.mulf %19, %20 : vector<16x128xf32>
    %c0_6 = arith.constant 0 : index
    %c0_7 = arith.constant 0 : index
    %22 = vector.load %arg3[%c0_6, %c0_7] : memref<16x128xf32, #tpu.memory_space<vmem>>, vector<16x128xf32>
    tpu.vector_store %arg3[%c0_6, %c0_7], %21 {strides = array<i32>} : memref<16x128xf32, #tpu.memory_space<vmem>>, vector<16x128xf32>,
    return
  }
  func.func @transform_0(%arg0: i32) -> i32 {
    %c0_i32 = arith.constant 0 : i32
    %c0_i32_0 = arith.constant 0 : i32
    return %c0_i32 : i32
  }
  func.func @transform_1(%arg0: i32) -> (i32, i32) {
    %c0_i32 = arith.constant 0 : i32
    %c0_i32_0 = arith.constant 0 : i32
    return %arg0, %c0_i32 : i32, i32
  }
  func.func @transform_2(%arg0: i32) -> (i32, i32) {
    %c0_i32 = arith.constant 0 : i32
    %c0_i32_0 = arith.constant 0 : i32
    return %arg0, %c0_i32 : i32, i32
  }
}

</mosaic_0001>

<llo_original>
// kernel: tpu_custom_call.1
$region0: #{tpu_custom_call.1}
  #allocation0 [shape = 'u32[]', space=smem, size = 0x4, offset = 0x4, fixed_abs, tag = 'smem constant byte address 0x4 - core index']
  #allocation1 [shape = 'u32[72,128]{1,0:T(1,128)}', space=vmem, size = 0x9000, scoped, tag = 'internal scratch']
  #allocation2 [shape = 'f32[1]{0:T(128)S(6)}', space=smem, size = 0x200, scoped, tag = 'scoped memory for tpu_custom_call.1']
  %s0 = inlined_call_operand.<no memory space> [shape: f32[1], index: 0, kind: input, shape index: {}]
  %s1 = inlined_call_operand.hbm [shape: f32[16,128], index: 1, kind: input, shape index: {}]
  %s2 = inlined_call_operand.hbm [shape: f32[16,128], index: 2, kind: output, shape index: {}]
  %s3 = sld [smem:[#allocation0]]
  $region22: #{tpu_custom_call.1} parent=0
    _
  %s5 = ssub.s32 1, %s3
  %s6 = scalar_select 0, %s5, %s3
  %7 = sst [smem:[#allocation2]] %s0
  $region1: #{tpu_custom_call.1} parent=0
    #allocation3 [shape = 'u8[8192]{0}', space=vmem, size = 0x2000, scoped, tag = 'input window, operand 1, single buffered']
    #allocation4 [shape = 's32[1]{0}', space=sflag, size = 0x4, scoped, tag = 'scoped memory for tpu_custom_call.1']
    #allocation5 [shape = 's32[1]{0}', space=sflag, size = 0x4, scoped, tag = 'scoped memory for tpu_custom_call.1']
    #allocation6 [shape = 'u8[8192]{0}', space=vmem, size = 0x2000, scoped, tag = 'output window, operand 0, single buffered']
    %8 = vsyncpa [#allocation4], 0
    %9 = vsyncpa [#allocation5], 0
    // Predicated region
    $region2: #{tpu_custom_call.1} parent=1 // pred_check
      _
    $region3: #{tpu_custom_call.1} parent=1 // pred_check_branch
      %11 = sbr.rel (0) target = $region5
    $region4: #{tpu_custom_call.1} parent=1 // pred_region
      _
    $region5: #{tpu_custom_call.1} parent=1 // pred_fallthru
      _
    // Predicated region
    $region6: #{tpu_custom_call.1} parent=1 // pred_check
      _
    $region7: #{tpu_custom_call.1} parent=1 // pred_check_branch
      %13 = sbr.rel (0) target = $region9
    $region8: #{tpu_custom_call.1} parent=1 // pred_region
      %15 = vsyncadd [#allocation4], 0
      %s16 = sshll.u32 %s1, 4
      %s17 = int_to_ptr.hbm [resolvable:$true] %s16
      %s18 = sshll.u32 [#allocation3], 4
      %s19 = int_to_ptr.vmem [resolvable:$true] %s18
      %24 = dma.hbm_to_vmem [thread:$0]  %s17, 256, %s19, [#allocation4], 128, 128, 8
    $region9: #{tpu_custom_call.1} parent=1 // pred_fallthru
      _
    // Predicated region
    $region10: #{tpu_custom_call.1} parent=1 // pred_check
      _
    $region11: #{tpu_custom_call.1} parent=1 // pred_check_branch
      %26 = sbr.rel (0) target = $region13
    $region12: #{tpu_custom_call.1} parent=1 // pred_region
      %28 = dma.done [#allocation4], 256
    $region13: #{tpu_custom_call.1} parent=1 // pred_fallthru
      _
    %v29 = vld [vmem:[#allocation3] sm:$0xff]
    %v30 = vld [vmem:[#allocation3 + $0x8] sm:$0xff]
    %31 = vadd.xlane.f32.xlu0 %v29
    %v32 = vpop.xlane.xlu0 %31
    %33 = vadd.xlane.f32.xlu0 %v30
    %v34 = vpop.xlane.xlu0 %33
    %v35 = vmul.f32 %v29, %v29
    %v36 = vmul.f32 %v30, %v30
    %37 = vadd.xlane.f32.xlu0 %v35
    %v38 = vpop.xlane.xlu0 %37
    %39 = vadd.xlane.f32.xlu0 %v36
    %v40 = vpop.xlane.xlu0 %39
    %v41 = vmul.f32 %v32, 0.0078125
    %v42 = vmul.f32 %v34, 0.0078125
    %v43 = vmul.f32 %v32, %v41
    %v44 = vmul.f32 %v34, %v42
    %v45 = vsub.f32 %v38, %v43
    %v46 = vsub.f32 %v40, %v44
    %v47 = vmul.f32 %v45, 0.007874016
    %v48 = vmul.f32 %v46, 0.007874016
    %v49 = vmax.f32 %v47, 0.0
    %v50 = vmax.f32 %v48, 0.0
    %v51 = vrsqrt.pop %v49
    %v52 = vmul.f32 %v51, %v49
    %v53 = vmul.f32 %v52, %v51
    %v54 = vmul.f32 0.5, %v53
    %v55 = vsub.f32 1.5, %v54
    %v56 = vmul.f32 %v51, %v55
    %vm57 = vweird.f32 %v49
    %vm58 = vweird.f32 %v51
    %vm59 = vmor %vm57, %vm58
    %v60 = vsel %vm59, %v51, %v56
    %v61 = vrsqrt.pop %v50
    %v62 = vmul.f32 %v61, %v50
    %v63 = vmul.f32 %v62, %v61
    %v64 = vmul.f32 0.5, %v63
    %v65 = vsub.f32 1.5, %v64
    %v66 = vmul.f32 %v61, %v65
    %vm67 = vweird.f32 %v50
    %vm68 = vweird.f32 %v61
    %vm69 = vmor %vm67, %vm68
    %v70 = vsel %vm69, %v61, %v66
    %s71 = sld [smem:[#allocation2]]
    %v72 = vstv %s71
    %v73 = vmul.f32 %v60, %v72
    %v74 = vmul.f32 %v70, %v72
    %v75 = vsub.f32 %v29, %v41
    %v76 = vsub.f32 %v30, %v42
    %v77 = vmul.f32 %v75, %v73
    %v78 = vmul.f32 %v76, %v74
    %79 = vst [vmem:[#allocation6] sm:$0xff] %v77
    %80 = vst [vmem:[#allocation6 + $0x8] sm:$0xff] %v78
    // Predicated region
    $region14: #{tpu_custom_call.1} parent=1 // pred_check
      _
    $region15: #{tpu_custom_call.1} parent=1 // pred_check_branch
      %82 = sbr.rel (0) target = $region17
    $region16: #{tpu_custom_call.1} parent=1 // pred_region
      %84 = vsyncadd [#allocation5], 0
      %s85 = sshll.u32 [#allocation6], 4
      %s86 = int_to_ptr.vmem [resolvable:$true] %s85
      %s87 = sshll.u32 %s2, 4
      %s88 = int_to_ptr.hbm [resolvable:$true] %s87
      %93 = dma.vmem_to_hbm [thread:$0]  %s86, 256, %s88, [#allocation5], 128, 128, 8
    $region17: #{tpu_custom_call.1} parent=1 // pred_fallthru
      _
    // Predicated region
    $region18: #{tpu_custom_call.1} parent=1 // pred_check
      _
    $region19: #{tpu_custom_call.1} parent=1 // pred_check_branch
      %95 = sbr.rel (0) target = $region21
    $region20: #{tpu_custom_call.1} parent=1 // pred_region
      %97 = dma.done [#allocation5], 256
    $region21: #{tpu_custom_call.1} parent=1 // pred_fallthru
      _
    %98 = vsyncpa [#allocation4], 1
    %99 = vsyncpa [#allocation5], 1

</llo_original>
